<compile_context>
chip_gen: v7x
topology: tpu7x:2x2x1
jax: 0.10.0
libtpu: 0.0.40
codegen_flags: <defaults>
</compile_context>

<pallas_src>
import functools

import jax
import jax.numpy as jnp
from jax.experimental import pallas as pl
from jax.experimental.pallas import tpu as pltpu


def _vfae_loss_kernel(n_rows, sup_count, needs_mask,
                      alpha_ref,
                      x_dec_ref, x_ref, lv_ref, mu_ref, y_dec_ref, y_ref,
                      out_ref,
                      acc_recon, acc_kl):
    """One batch-tile per grid step.  Per-tile sums accumulate into (1,1) VMEM
    scalars; the supervised term and the final combine run once on the last
    grid step."""
    i = pl.program_id(0)
    last = pl.num_programs(0) - 1
    tb = x_ref.shape[0]

    @pl.when(i == 0)
    def _init():
        acc_recon[...] = jnp.zeros_like(acc_recon)
        acc_kl[...] = jnp.zeros_like(acc_kl)

    def accumulate(mask_rows):
        # ---- reconstruction BCE, sum-reduced -------------------------------
        # Binary targets: x*log(p) + (1-x)*log(1-p) == log(where(x>0.5, p, 1-p))
        # with the PyTorch -100 clamp applied to the selected log.
        xd = x_dec_ref[...].astype(jnp.float32)
        x = x_ref[...].astype(jnp.float32)
        p_sel = jnp.where(x > 0.5, xd, 1.0 - xd)
        bce_x = -jnp.maximum(jnp.log(p_sel), -100.0)

        # ---- KL( N(mu, exp(logvar)) || N(0, I) ), elementwise part ----------
        lv = lv_ref[...].astype(jnp.float32)
        mu = mu_ref[...].astype(jnp.float32)
        kl_e = -lv - 1.0 + jnp.exp(lv) + mu * mu

        if mask_rows:
            # Only reached on the (single) partial last tile.  Select-based so
            # NaNs from log(garbage) in padded rows never reach the sums.
            row = jax.lax.broadcasted_iota(jnp.int32, (tb, 1), 0)
            valid = (i * tb + row) < n_rows
            bce_x = jnp.where(valid, bce_x, 0.0)
            kl_e = jnp.where(valid, kl_e, 0.0)

        acc_recon[...] += jnp.sum(bce_x, keepdims=True)
        acc_kl[...] += jnp.sum(kl_e, keepdims=True)

    if needs_mask:
        @pl.when(i < last)
        def _hot():
            accumulate(False)

        @pl.when(i == last)
        def _tail():
            accumulate(True)
    else:
        accumulate(False)

    # ---- finalize: supervised BCE (lane-dense, computed once) + combine ----
    @pl.when(i == last)
    def _finalize():
        yd = y_dec_ref[...].astype(jnp.float32)      # (1, N*dy), full arrays
        y = y_ref[...].astype(jnp.float32)
        py_sel = jnp.where(y > 0.5, yd, 1.0 - yd)
        bce_y = -jnp.maximum(jnp.log(py_sel), -100.0)
        sup_sum = jnp.sum(bce_y, keepdims=True)      # (1, 1)

        alpha = alpha_ref[0, 0]
        recon = acc_recon[...]
        kl = 0.5 * acc_kl[...]
        loss = (recon + kl) / jnp.float32(n_rows) * 0.1
        loss = loss + alpha * (sup_sum / jnp.float32(sup_count))
        out_ref[...] = loss


def vfae_loss(y_pred, y_true, *, alpha=1.0, tile_batch=None,
              vmem_budget_bytes=32 * 1024 * 1024):
    """Pallas implementation of VFAELoss.forward.  Returns a scalar float32.

    tile_batch=None sizes the batch tile from `vmem_budget_bytes` (bytes of
    double-buffered, lane-padded input tiles), which is the right knob for
    this HBM-bandwidth-bound reduction; pass an explicit multiple of 8 to
    override (used by the test to exercise the masked partial tile).
    """
    x_dec = y_pred["x_decoded"]
    y_dec = y_pred["y_decoded"]
    logvar = y_pred["z1_enc_logvar"]
    mu = y_pred["z1_enc_mu"]
    x = y_true["x"]
    y = y_true["y"]

    n, d = x.shape
    z = mu.shape[1]

    # Lane-dense, contiguous (free) views of the narrow supervised pair.
    y_dec2 = y_dec.reshape(1, -1)
    y2 = y.reshape(1, -1)
    ny = y_dec2.shape[1]                      # N * dy  (mean divisor)

    # ---- VMEM budgeting (bytes, lane-padded, double-buffered) --------------
    def lane_bytes(feat, dt):
        return ((feat + 127) // 128) * 128 * jnp.dtype(dt).itemsize

    per_row = 2 * (lane_bytes(d, x_dec.dtype) + lane_bytes(d, x.dtype)
                   + lane_bytes(z, logvar.dtype) + lane_bytes(z, mu.dtype))
    y_vmem = 2 * (lane_bytes(ny, y_dec.dtype) + lane_bytes(ny, y.dtype))
    scratch_vmem = 3 * 8 * 128 * 4            # two (1,1) accumulators + (1,1) out
    avail = int(vmem_budget_bytes) - y_vmem - scratch_vmem
    assert avail > per_row, (
        "supervised-term arrays / budget too small; raise vmem_budget_bytes")

    if tile_batch is None:
        tb = max(8, (avail // per_row) // 8 * 8)
    else:
        assert tile_batch % 8 == 0, "tile_batch must be a multiple of 8 (sublanes)"
        tb = tile_batch
    if tb >= n:
        tb = n                                 # single full-dim tile, no masking
    num_tiles = pl.cdiv(n, tb)
    needs_mask = (n % tb) != 0

    # Scoped-VMEM limit: budget + headroom; within v7x's 64 MiB physical VMEM,
    # raises v5e's 16 MiB default scoped limit.
    vmem_limit = int(min(112 * 1024 * 1024, int(vmem_budget_bytes) + (16 << 20)))

    # Cheap scheduling hint for XLA around the custom call.
    elems = n * d + n * z + ny
    bytes_accessed = int(sum(int(a.size) * jnp.dtype(a.dtype).itemsize
                             for a in (x_dec, x, logvar, mu, y_dec, y)) + 8)
    cost = pl.CostEstimate(flops=6 * elems, transcendentals=elems,
                           bytes_accessed=bytes_accessed)

    alpha_arr = jnp.full((1, 1), alpha, dtype=jnp.float32)   # SMEM scalar
    kernel = functools.partial(_vfae_loss_kernel, n, ny, needs_mask)

    out = pl.pallas_call(
        kernel,
        out_shape=jax.ShapeDtypeStruct((1, 1), jnp.float32),
        grid=(num_tiles,),
        in_specs=[
            pl.BlockSpec(memory_space=pltpu.MemorySpace.SMEM),   # alpha (1,1)
            pl.BlockSpec((tb, d), lambda i: (i, 0)),             # x_decoded
            pl.BlockSpec((tb, d), lambda i: (i, 0)),             # x
            pl.BlockSpec((tb, z), lambda i: (i, 0)),             # z1_enc_logvar
            pl.BlockSpec((tb, z), lambda i: (i, 0)),             # z1_enc_mu
            pl.BlockSpec((1, ny), lambda i: (0, 0)),             # y_decoded (resident)
            pl.BlockSpec((1, ny), lambda i: (0, 0)),             # y         (resident)
        ],
        out_specs=pl.BlockSpec((1, 1), lambda i: (0, 0)),
        scratch_shapes=[
            pltpu.VMEM((1, 1), jnp.float32),   # running reconstruction sum
            pltpu.VMEM((1, 1), jnp.float32),   # running KL sum
        ],
        compiler_params=pltpu.CompilerParams(
            dimension_semantics=("arbitrary",),       # grid axis is a reduction
            vmem_limit_bytes=vmem_limit),
        cost_estimate=cost,
    )(alpha_arr, x_dec, x, logvar, mu, y_dec2, y2)
    return out[0, 0]


def _reference_loss(y_pred, y_true, alpha=1.0):
    """Pure-JAX reference mirroring the PyTorch forward (f32 math)."""
    x, y = y_true["x"].astype(jnp.float32), y_true["y"].astype(jnp.float32)
    xd = y_pred["x_decoded"].astype(jnp.float32)
    yd = y_pred["y_decoded"].astype(jnp.float32)
    lv = y_pred["z1_enc_logvar"].astype(jnp.float32)
    mu = y_pred["z1_enc_mu"].astype(jnp.float32)

    def bce(pred, tgt):
        lp = jnp.maximum(jnp.log(pred), -100.0)
        l1 = jnp.maximum(jnp.log(1.0 - pred), -100.0)
        return -(tgt * lp + (1.0 - tgt) * l1)

    supervised = jnp.mean(bce(yd, y))
    recon = jnp.sum(bce(xd, x))
    kl = 0.5 * jnp.sum(-lv - 1.0 + jnp.exp(lv) + mu * mu)
    n = y.shape[0]
    return recon / n * 0.1 + kl / n * 0.1 + alpha * supervised


if __name__ == "__main__":
    # Small deterministic synthetic shapes consistent with a VFAE:
    #   batch N=20 (NOT a multiple of 8, to exercise the masked partial tile
    #   when tile_batch=8 is forced), input dim D=32, latent Z=16, label dim 1.
    key = jax.random.PRNGKey(0)
    k = jax.random.split(key, 8)
    N, D, Z = 20, 32, 16

    x = (jax.random.uniform(k[0], (N, D)) > 0.5).astype(jnp.float32)   # binary targets
    s = (jax.random.uniform(k[1], (N, 1)) > 0.5).astype(jnp.float32)
    y = (jax.random.uniform(k[2], (N, 1)) > 0.5).astype(jnp.float32)

    x_decoded = jax.nn.sigmoid(jax.random.normal(k[3], (N, D)))        # probabilities
    y_decoded = jax.nn.sigmoid(jax.random.normal(k[4], (N, 1)))
    z1_enc_mu = jax.random.normal(k[5], (N, Z))
    z1_enc_logvar = 0.1 * jax.random.normal(k[6], (N, Z))

    y_pred = {
        "x_decoded": x_decoded,
        "y_decoded": y_decoded,
        "z1_enc_logvar": z1_enc_logvar,
        "z1_enc_mu": z1_enc_mu,
    }
    y_true = {"x": x, "s": s, "y": y}

    ref = _reference_loss(y_pred, y_true, alpha=1.0)

    # 1) auto-sized tiles (at this tiny N this is one full-batch tile, unmasked)
    out_auto = jax.block_until_ready(vfae_loss(y_pred, y_true, alpha=1.0))
    # 2) forced 8-row tiles: 3 grid steps including a masked partial last tile
    out_tiled = jax.block_until_ready(
        vfae_loss(y_pred, y_true, alpha=1.0, tile_batch=8))

    assert jnp.allclose(out_auto, ref, rtol=1e-5, atol=1e-5), (out_auto, ref)
    assert jnp.allclose(out_tiled, ref, rtol=1e-5, atol=1e-5), (out_tiled, ref)
    print("KERNEL_OK")
</pallas_src>

<mosaic_0001>
module attributes {stable_mosaic.version = 11 : i64} {
  func.func @_vfae_loss_kernel(%arg0: i32, %arg1: memref<1x1xf32, #tpu.memory_space<smem>>, %arg2: memref<20x32xf32, #tpu.memory_space<vmem>>, %arg3: memref<20x32xf32, #tpu.memory_space<vmem>>, %arg4: memref<20x16xf32, #tpu.memory_space<vmem>>, %arg5: memref<20x16xf32, #tpu.memory_space<vmem>>, %arg6: memref<1x20xf32, #tpu.memory_space<vmem>>, %arg7: memref<1x20xf32, #tpu.memory_space<vmem>>, %arg8: memref<1x1xf32, #tpu.memory_space<vmem>>, %arg9: memref<1x1xf32, #tpu.memory_space<vmem>>, %arg10: memref<1x1xf32, #tpu.memory_space<vmem>>) attributes {dimension_semantics = [#tpu.dimension_semantics<arbitrary>], iteration_bounds = array<i64: 1>, scalar_prefetch = 0 : i64, scratch_operands = 2 : i64, tpu.core_type = #tpu.core_type<tc>, window_params = [{transform_indices = @transform_0, window_bounds = array<i64: 1, 1>}, {transform_indices = @transform_1, window_bounds = array<i64: 20, 32>}, {transform_indices = @transform_2, window_bounds = array<i64: 20, 32>}, {transform_indices = @transform_3, window_bounds = array<i64: 20, 16>}, {transform_indices = @transform_4, window_bounds = array<i64: 20, 16>}, {pipeline_mode = #tpu.pipeline_mode<synchronous>, transform_indices = @transform_5, window_bounds = array<i64: 1, 20>}, {pipeline_mode = #tpu.pipeline_mode<synchronous>, transform_indices = @transform_6, window_bounds = array<i64: 1, 20>}, {pipeline_mode = #tpu.pipeline_mode<synchronous>, transform_indices = @transform_7, window_bounds = array<i64: 1, 1>}]} {
    %c0_i32 = arith.constant 0 : i32
    %0 = arith.cmpi eq, %arg0, %c0_i32 : i32
    %1 = arith.extui %0 : i1 to i32
    %c0_i32_0 = arith.constant 0 : i32
    %2 = arith.cmpi ne, %1, %c0_i32_0 : i32
    scf.if %2 {
      %cst_25 = arith.constant 0.000000e+00 : f32
      %44 = vector.broadcast %cst_25 : f32 to vector<1x1xf32>
      %c0_26 = arith.constant 0 : index
      %c0_27 = arith.constant 0 : index
      %45 = vector.load %arg9[%c0_26, %c0_27] : memref<1x1xf32, #tpu.memory_space<vmem>>, vector<1x1xf32>
      tpu.vector_store %arg9[%c0_26, %c0_27], %44 {strides = array<i32>} : memref<1x1xf32, #tpu.memory_space<vmem>>, vector<1x1xf32>,
      %cst_28 = arith.constant 0.000000e+00 : f32
      %46 = vector.broadcast %cst_28 : f32 to vector<1x1xf32>
      %c0_29 = arith.constant 0 : index
      %c0_30 = arith.constant 0 : index
      %47 = vector.load %arg10[%c0_29, %c0_30] : memref<1x1xf32, #tpu.memory_space<vmem>>, vector<1x1xf32>
      tpu.vector_store %arg10[%c0_29, %c0_30], %46 {strides = array<i32>} : memref<1x1xf32, #tpu.memory_space<vmem>>, vector<1x1xf32>,
    } else {
    }
    %c0 = arith.constant 0 : index
    %c0_1 = arith.constant 0 : index
    %3 = vector.load %arg2[%c0, %c0_1] : memref<20x32xf32, #tpu.memory_space<vmem>>, vector<20x32xf32>
    %c0_2 = arith.constant 0 : index
    %c0_3 = arith.constant 0 : index
    %4 = vector.load %arg3[%c0_2, %c0_3] : memref<20x32xf32, #tpu.memory_space<vmem>>, vector<20x32xf32>
    %cst = arith.constant 5.000000e-01 : f32
    %5 = vector.broadcast %cst : f32 to vector<20x32xf32>
    %6 = arith.cmpf ogt, %4, %5 : vector<20x32xf32>
    %cst_4 = arith.constant 1.000000e+00 : f32
    %7 = vector.broadcast %cst_4 : f32 to vector<20x32xf32>
    %8 = arith.subf %7, %3 : vector<20x32xf32>
    %9 = arith.select %6, %3, %8 : vector<20x32xi1>, vector<20x32xf32>
    %10 = math.log %9 : vector<20x32xf32>
    %cst_5 = arith.constant -1.000000e+02 : f32
    %11 = vector.broadcast %cst_5 : f32 to vector<20x32xf32>
    %12 = arith.maximumf %10, %11 : vector<20x32xf32>
    %cst_6 = arith.constant 0.000000e+00 : f32
    %13 = vector.broadcast %cst_6 : f32 to vector<20x32xf32>
    %14 = arith.subf %13, %12 : vector<20x32xf32>
    %c0_7 = arith.constant 0 : index
    %c0_8 = arith.constant 0 : index
    %15 = vector.load %arg4[%c0_7, %c0_8] : memref<20x16xf32, #tpu.memory_space<vmem>>, vector<20x16xf32>
    %c0_9 = arith.constant 0 : index
    %c0_10 = arith.constant 0 : index
    %16 = vector.load %arg5[%c0_9, %c0_10] : memref<20x16xf32, #tpu.memory_space<vmem>>, vector<20x16xf32>
    %cst_11 = arith.constant 0.000000e+00 : f32
    %17 = vector.broadcast %cst_11 : f32 to vector<20x16xf32>
    %18 = arith.subf %17, %15 : vector<20x16xf32>
    %cst_12 = arith.constant 1.000000e+00 : f32
    %19 = vector.broadcast %cst_12 : f32 to vector<20x16xf32>
    %20 = arith.subf %18, %19 : vector<20x16xf32>
    %21 = math.exp %15 : vector<20x16xf32>
    %22 = arith.addf %20, %21 : vector<20x16xf32>
    %23 = arith.mulf %16, %16 : vector<20x16xf32>
    %24 = arith.addf %22, %23 : vector<20x16xf32>
    %c0_13 = arith.constant 0 : index
    %c0_14 = arith.constant 0 : index
    %25 = vector.load %arg9[%c0_13, %c0_14] : memref<1x1xf32, #tpu.memory_space<vmem>>, vector<1x1xf32>
    %26 = vector.shape_cast %14 : vector<20x32xf32> to vector<1x20x32xf32>
    %cst_15 = arith.constant dense<0.000000e+00> : vector<1xf32>
    %27 = vector.multi_reduction <add>, %26, %cst_15 [1, 2] : vector<1x20x32xf32> to vector<1xf32>
    %28 = vector.shape_cast %27 : vector<1xf32> to vector<1x1x1xf32>
    %29 = vector.extract %28[0, 0, 0] : f32 from vector<1x1x1xf32>
    %30 = vector.broadcast %29 : f32 to vector<1x1xf32>
    %31 = arith.addf %25, %30 : vector<1x1xf32>
    %c0_16 = arith.constant 0 : index
    %c0_17 = arith.constant 0 : index
    %32 = vector.load %arg9[%c0_16, %c0_17] : memref<1x1xf32, #tpu.memory_space<vmem>>, vector<1x1xf32>
    tpu.vector_store %arg9[%c0_16, %c0_17], %31 {strides = array<i32>} : memref<1x1xf32, #tpu.memory_space<vmem>>, vector<1x1xf32>,
    %c0_18 = arith.constant 0 : index
    %c0_19 = arith.constant 0 : index
    %33 = vector.load %arg10[%c0_18, %c0_19] : memref<1x1xf32, #tpu.memory_space<vmem>>, vector<1x1xf32>
    %34 = vector.shape_cast %24 : vector<20x16xf32> to vector<1x20x16xf32>
    %cst_20 = arith.constant dense<0.000000e+00> : vector<1xf32>
    %35 = vector.multi_reduction <add>, %34, %cst_20 [1, 2] : vector<1x20x16xf32> to vector<1xf32>
    %36 = vector.shape_cast %35 : vector<1xf32> to vector<1x1x1xf32>
    %37 = vector.extract %36[0, 0, 0] : f32 from vector<1x1x1xf32>
    %38 = vector.broadcast %37 : f32 to vector<1x1xf32>
    %39 = arith.addf %33, %38 : vector<1x1xf32>
    %c0_21 = arith.constant 0 : index
    %c0_22 = arith.constant 0 : index
    %40 = vector.load %arg10[%c0_21, %c0_22] : memref<1x1xf32, #tpu.memory_space<vmem>>, vector<1x1xf32>
    tpu.vector_store %arg10[%c0_21, %c0_22], %39 {strides = array<i32>} : memref<1x1xf32, #tpu.memory_space<vmem>>, vector<1x1xf32>,
    %c0_i32_23 = arith.constant 0 : i32
    %41 = arith.cmpi eq, %arg0, %c0_i32_23 : i32
    %42 = arith.extui %41 : i1 to i32
    %c0_i32_24 = arith.constant 0 : i32
    %43 = arith.cmpi ne, %42, %c0_i32_24 : i32
    scf.if %43 {
      %c0_25 = arith.constant 0 : index
      %c0_26 = arith.constant 0 : index
      %44 = vector.load %arg6[%c0_25, %c0_26] : memref<1x20xf32, #tpu.memory_space<vmem>>, vector<1x20xf32>
      %c0_27 = arith.constant 0 : index
      %c0_28 = arith.constant 0 : index
      %45 = vector.load %arg7[%c0_27, %c0_28] : memref<1x20xf32, #tpu.memory_space<vmem>>, vector<1x20xf32>
      %cst_29 = arith.constant 5.000000e-01 : f32
      %46 = vector.broadcast %cst_29 : f32 to vector<1x20xf32>
      %47 = arith.cmpf ogt, %45, %46 : vector<1x20xf32>
      %cst_30 = arith.constant 1.000000e+00 : f32
      %48 = vector.broadcast %cst_30 : f32 to vector<1x20xf32>
      %49 = arith.subf %48, %44 : vector<1x20xf32>
      %50 = arith.select %47, %44, %49 : vector<1x20xi1>, vector<1x20xf32>
      %51 = math.log %50 : vector<1x20xf32>
      %cst_31 = arith.constant -1.000000e+02 : f32
      %52 = vector.broadcast %cst_31 : f32 to vector<1x20xf32>
      %53 = arith.maximumf %51, %52 : vector<1x20xf32>
      %cst_32 = arith.constant 0.000000e+00 : f32
      %54 = vector.broadcast %cst_32 : f32 to vector<1x20xf32>
      %55 = arith.subf %54, %53 : vector<1x20xf32>
      %56 = vector.shape_cast %55 : vector<1x20xf32> to vector<1x1x20xf32>
      %cst_33 = arith.constant dense<0.000000e+00> : vector<1xf32>
      %57 = vector.multi_reduction <add>, %56, %cst_33 [1, 2] : vector<1x1x20xf32> to vector<1xf32>
      %58 = vector.shape_cast %57 : vector<1xf32> to vector<1x1x1xf32>
      %59 = vector.extract %58[0, 0, 0] : f32 from vector<1x1x1xf32>
      %60 = vector.broadcast %59 : f32 to vector<1x1xf32>
      %c0_34 = arith.constant 0 : index
      %c0_35 = arith.constant 0 : index
      %61 = memref.load %arg1[%c0_34, %c0_35] : memref<1x1xf32, #tpu.memory_space<smem>>
      %c0_36 = arith.constant 0 : index
      %c0_37 = arith.constant 0 : index
      %62 = vector.load %arg9[%c0_36, %c0_37] : memref<1x1xf32, #tpu.memory_space<vmem>>, vector<1x1xf32>
      %c0_38 = arith.constant 0 : index
      %c0_39 = arith.constant 0 : index
      %63 = vector.load %arg10[%c0_38, %c0_39] : memref<1x1xf32, #tpu.memory_space<vmem>>, vector<1x1xf32>
      %cst_40 = arith.constant 5.000000e-01 : f32
      %64 = vector.broadcast %cst_40 : f32 to vector<1x1xf32>
      %65 = arith.mulf %64, %63 : vector<1x1xf32>
      %66 = arith.addf %62, %65 : vector<1x1xf32>
      %cst_41 = arith.constant 2.000000e+01 : f32
      %67 = vector.broadcast %cst_41 : f32 to vector<1x1xf32>
      %68 = arith.divf %66, %67 : vector<1x1xf32>
      %cst_42 = arith.constant 1.000000e-01 : f32
      %69 = vector.broadcast %cst_42 : f32 to vector<1x1xf32>
      %70 = arith.mulf %68, %69 : vector<1x1xf32>
      %cst_43 = arith.constant 2.000000e+01 : f32
      %71 = vector.broadcast %cst_43 : f32 to vector<1x1xf32>
      %72 = arith.divf %60, %71 : vector<1x1xf32>
      %73 = vector.broadcast %61 : f32 to vector<1x1xf32>
      %74 = arith.mulf %73, %72 : vector<1x1xf32>
      %75 = arith.addf %70, %74 : vector<1x1xf32>
      %c0_44 = arith.constant 0 : index
      %c0_45 = arith.constant 0 : index
      %76 = vector.load %arg8[%c0_44, %c0_45] : memref<1x1xf32, #tpu.memory_space<vmem>>, vector<1x1xf32>
      tpu.vector_store %arg8[%c0_44, %c0_45], %75 {strides = array<i32>} : memref<1x1xf32, #tpu.memory_space<vmem>>, vector<1x1xf32>,
    } else {
    }
    return
  }
  func.func @transform_0(%arg0: i32) -> (i32, i32) {
    %c0_i32 = arith.constant 0 : i32
    %c0_i32_0 = arith.constant 0 : i32
    %c0_i32_1 = arith.constant 0 : i32
    return %c0_i32, %c0_i32_0 : i32, i32
  }
  func.func @transform_1(%arg0: i32) -> (i32, i32) {
    %c0_i32 = arith.constant 0 : i32
    %c0_i32_0 = arith.constant 0 : i32
    return %arg0, %c0_i32 : i32, i32
  }
  func.func @transform_2(%arg0: i32) -> (i32, i32) {
    %c0_i32 = arith.constant 0 : i32
    %c0_i32_0 = arith.constant 0 : i32
    return %arg0, %c0_i32 : i32, i32
  }
  func.func @transform_3(%arg0: i32) -> (i32, i32) {
    %c0_i32 = arith.constant 0 : i32
    %c0_i32_0 = arith.constant 0 : i32
    return %arg0, %c0_i32 : i32, i32
  }
  func.func @transform_4(%arg0: i32) -> (i32, i32) {
    %c0_i32 = arith.constant 0 : i32
    %c0_i32_0 = arith.constant 0 : i32
    return %arg0, %c0_i32 : i32, i32
  }
  func.func @transform_5(%arg0: i32) -> (i32, i32) {
    %c0_i32 = arith.constant 0 : i32
    %c0_i32_0 = arith.constant 0 : i32
    %c0_i32_1 = arith.constant 0 : i32
    return %c0_i32, %c0_i32_0 : i32, i32
  }
  func.func @transform_6(%arg0: i32) -> (i32, i32) {
    %c0_i32 = arith.constant 0 : i32
    %c0_i32_0 = arith.constant 0 : i32
    %c0_i32_1 = arith.constant 0 : i32
    return %c0_i32, %c0_i32_0 : i32, i32
  }
  func.func @transform_7(%arg0: i32) -> (i32, i32) {
    %c0_i32 = arith.constant 0 : i32
    %c0_i32_0 = arith.constant 0 : i32
    %c0_i32_1 = arith.constant 0 : i32
    return %c0_i32, %c0_i32_0 : i32, i32
  }
}

</mosaic_0001>

<llo_original>
// kernel: tpu_custom_call.1
$region0: #{tpu_custom_call.1}
  #allocation0 [shape = 'u32[]', space=smem, size = 0x4, offset = 0x4, fixed_abs, tag = 'smem constant byte address 0x4 - core index']
  #allocation1 [shape = 'u32[144,128]{1,0:T(1,128)}', space=vmem, size = 0x12000, scoped, tag = 'internal scratch']
  #allocation2 [shape = 'f32[1,1]{1,0:T(1,128)}', space=vmem, size = 0x200, scoped, tag = 'scratch operand']
  #allocation3 [shape = 'f32[1,1]{1,0:T(1,128)}', space=vmem, size = 0x200, scoped, tag = 'scratch operand']
  #allocation4 [shape = 'f32[1,1]{1,0:T(1,128)S(6)}', space=smem, size = 0x200, scoped, tag = 'scoped memory for tpu_custom_call.1']
  %s0 = inlined_call_operand.<no memory space> [shape: f32[1,1], index: 0, kind: input, shape index: {}]
  %s1 = inlined_call_operand.vmem [shape: f32[20,32], index: 1, kind: input, shape index: {}]
  %s2 = inlined_call_operand.vmem [shape: f32[20,32], index: 2, kind: input, shape index: {}]
  %s3 = inlined_call_operand.vmem [shape: f32[20,16], index: 3, kind: input, shape index: {}]
  %s4 = inlined_call_operand.vmem [shape: f32[20,16], index: 4, kind: input, shape index: {}]
  %s5 = inlined_call_operand.vmem [shape: f32[1,20], index: 5, kind: input, shape index: {}]
  %s6 = inlined_call_operand.vmem [shape: f32[1,20], index: 6, kind: input, shape index: {}]
  %s7 = inlined_call_operand.hbm [shape: f32[1,1], index: 7, kind: output, shape index: {}]
  %s8 = sld [smem:[#allocation0]]
  $region46: #{tpu_custom_call.1} parent=0
    _
  %s10 = ssub.s32 1, %s8
  %s11 = scalar_select 0, %s10, %s8
  %12 = sst [smem:[#allocation4]] %s0
  $region1: #{tpu_custom_call.1} parent=0
    #allocation5 [shape = 'u8[512]{0}', space=vmem, size = 0x400, scoped, tag = 'output window, operand 0, single buffered']
    #allocation6 [shape = 's32[1]{0}', space=sflag, size = 0x4, scoped, tag = 'scoped memory for tpu_custom_call.1']
    %13 = vsyncpa [#allocation6], 0
    // Predicated region
    $region2: #{tpu_custom_call.1} parent=1 // pred_check
      _
    $region3: #{tpu_custom_call.1} parent=1 // pred_check_branch
      %15 = sbr.rel (0) target = $region5
    $region4: #{tpu_custom_call.1} parent=1 // pred_region
      _
    $region5: #{tpu_custom_call.1} parent=1 // pred_fallthru
      _
    // Predicated region
    $region6: #{tpu_custom_call.1} parent=1 // pred_check
      _
    $region7: #{tpu_custom_call.1} parent=1 // pred_check_branch
      %17 = sbr.rel (0) target = $region9
    $region8: #{tpu_custom_call.1} parent=1 // pred_region
      _
    $region9: #{tpu_custom_call.1} parent=1 // pred_fallthru
      _
    // Predicated region
    $region10: #{tpu_custom_call.1} parent=1 // pred_check
      _
    $region11: #{tpu_custom_call.1} parent=1 // pred_check_branch
      %19 = sbr.rel (0) target = $region13
    $region12: #{tpu_custom_call.1} parent=1 // pred_region
      _
    $region13: #{tpu_custom_call.1} parent=1 // pred_fallthru
      _
    // Predicated region
    $region14: #{tpu_custom_call.1} parent=1 // pred_check
      _
    $region15: #{tpu_custom_call.1} parent=1 // pred_check_branch
      %21 = sbr.rel (0) target = $region17
    $region16: #{tpu_custom_call.1} parent=1 // pred_region
      _
    $region17: #{tpu_custom_call.1} parent=1 // pred_fallthru
      _
    // Predicated region
    $region18: #{tpu_custom_call.1} parent=1 // pred_check
      _
    $region19: #{tpu_custom_call.1} parent=1 // pred_check_branch
      %23 = sbr.rel (0) target = $region21
    $region20: #{tpu_custom_call.1} parent=1 // pred_region
      _
    $region21: #{tpu_custom_call.1} parent=1 // pred_fallthru
      _
    // Predicated region
    $region22: #{tpu_custom_call.1} parent=1 // pred_check
      _
    $region23: #{tpu_custom_call.1} parent=1 // pred_check_branch
      %25 = sbr.rel (0) target = $region25
    $region24: #{tpu_custom_call.1} parent=1 // pred_region
      _
    $region25: #{tpu_custom_call.1} parent=1 // pred_fallthru
      _
    // Predicated region
    $region26: #{tpu_custom_call.1} parent=1 // pred_check
      _
    $region27: #{tpu_custom_call.1} parent=1 // pred_check_branch
      %27 = sbr.rel (0) target = $region29
    $region28: #{tpu_custom_call.1} parent=1 // pred_region
      _
    $region29: #{tpu_custom_call.1} parent=1 // pred_fallthru
      _
    %p28 = scmp.eq.s32.totalorder 0, 0
    // Predicated region
    $region30: #{tpu_custom_call.1} parent=1 // pred_check
      %p29 = pneg %p28
    $region31: #{tpu_custom_call.1} parent=1 // pred_check_branch
      %31 = sbr.rel (%p29) target = $region33
    $region32: #{tpu_custom_call.1} parent=1 // pred_region
      %vm32 = vcmask 0
      %33 = vst.msk [vmem:[#allocation2] sm:$0x1] %vm32, 0.0
      %34 = vst.msk [vmem:[#allocation3] sm:$0x1] %vm32, 0.0
    $region33: #{tpu_custom_call.1} parent=1 // pred_fallthru
      _
    %v35 = vld [vmem:[%s1] sm:$0xff]
    %v36 = vld [vmem:[%s1 + $0x8] sm:$0xff]
    %v37 = vld [vmem:[%s1 + $0x10] sm:$0xf]
    %v38 = vld [vmem:[%s2] sm:$0xff]
    %v39 = vld [vmem:[%s2 + $0x8] sm:$0xff]
    %v40 = vld [vmem:[%s2 + $0x10] sm:$0xf]
    %vm41 = vcmp.gt.f32.partialorder %v38, 0.5
    %vm42 = vcmp.gt.f32.partialorder %v39, 0.5
    %vm43 = vcmp.gt.f32.partialorder %v40, 0.5
    %v44 = vsub.f32 1.0, %v35
    %v45 = vsub.f32 1.0, %v36
    %v46 = vsub.f32 1.0, %v37
    %v47 = vsel %vm41, %v35, %v44
    %v48 = vsel %vm42, %v36, %v45
    %v49 = vsel %vm43, %v37, %v46
    %v50 = vlog2.pop %v47
    %v51 = vmul.f32 %v50, 0.6931472
    %v52 = vlog2.pop %v48
    %v53 = vmul.f32 %v52, 0.6931472
    %v54 = vlog2.pop %v49
    %v55 = vmul.f32 %v54, 0.6931472
    %v56 = vmax.f32 %v51, -100.0
    %v57 = vmax.f32 %v53, -100.0
    %v58 = vmax.f32 %v55, -100.0
    %v59 = vsub.f32 0.0, %v56
    %v60 = vsub.f32 0.0, %v57
    %v61 = vsub.f32 0.0, %v58
    %v62 = vld [vmem:[%s3] sm:$0xff]
    %v63 = vld [vmem:[%s3 + $0x8] sm:$0xff]
    %v64 = vld [vmem:[%s3 + $0x10] sm:$0xf]
    %v65 = vld [vmem:[%s4] sm:$0xff]
    %v66 = vld [vmem:[%s4 + $0x8] sm:$0xff]
    %v67 = vld [vmem:[%s4 + $0x10] sm:$0xf]
    %v68 = vsub.f32 0.0, %v62
    %v69 = vsub.f32 0.0, %v63
    %v70 = vsub.f32 0.0, %v64
    %v71 = vsub.f32 %v68, 1.0
    %v72 = vsub.f32 %v69, 1.0
    %v73 = vsub.f32 %v70, 1.0
    %v74 = vmul.f32 %v62, 1.442695
    %v75 = vpow.pop %v74
    %v76 = vmul.f32 %v63, 1.442695
    %v77 = vpow.pop %v76
    %v78 = vmul.f32 %v64, 1.442695
    %v79 = vpow.pop %v78
    %v80 = vadd.f32 %v71, %v75
    %v81 = vadd.f32 %v72, %v77
    %v82 = vadd.f32 %v73, %v79
    %v83 = vmul.f32 %v65, %v65
    %v84 = vmul.f32 %v66, %v66
    %v85 = vmul.f32 %v67, %v67
    %v86 = vadd.f32 %v80, %v83
    %v87 = vadd.f32 %v81, %v84
    %v88 = vadd.f32 %v82, %v85
    %v89 = vld [vmem:[#allocation2] sm:$0x1]
    %vm90 = vcmask 261120
    %v91 = vsel %vm90, %v59, 0.0
    %v92 = vsel %vm90, %v60, 0.0
    %v93 = vadd.f32 %v91, %v92
    %vm94 = vcmask 257024
    %v95 = vsel %vm94, %v61, 0.0
    %v96 = vadd.f32 %v93, %v95
    %97 = vadd.xlane.f32.xlu0 %v96
    %v98 = vpop.xlane.xlu0 %97
    %v99 = vrot.slane %v98, 4
    %v100 = vadd.f32 %v98, %v99
    %v101 = vrot.slane %v100, 2
    %v102 = vadd.f32 %v100, %v101
    %v103 = vrot.slane %v102, 1
    %v104 = vadd.f32 %v102, %v103
    %s105 = vtos %v104
    %v106 = vstv %s105
    %v107 = vadd.f32 %v89, %v106
    %vm108 = vcmask 0
    %109 = vst.msk [vmem:[#allocation2] sm:$0x1] %vm108, %v107
    %v110 = vld [vmem:[#allocation3] sm:$0x1]
    %vm111 = vcmask 130048
    %v112 = vsel %vm111, %v86, 0.0
    %v113 = vsel %vm111, %v87, 0.0
    %v114 = vadd.f32 %v112, %v113
    %vm115 = vcmask 125952
    %v116 = vsel %vm115, %v88, 0.0
    %v117 = vadd.f32 %v114, %v116
    %118 = vadd.xlane.f32.xlu0 %v117
    %v119 = vpop.xlane.xlu0 %118
    %v120 = vrot.slane %v119, 4
    %v121 = vadd.f32 %v119, %v120
    %v122 = vrot.slane %v121, 2
    %v123 = vadd.f32 %v121, %v122
    %v124 = vrot.slane %v123, 1
    %v125 = vadd.f32 %v123, %v124
    %s126 = vtos %v125
    %v127 = vstv %s126
    %v128 = vadd.f32 %v110, %v127
    %129 = vst.msk [vmem:[#allocation3] sm:$0x1] %vm108, %v128
    // Predicated region
    $region34: #{tpu_custom_call.1} parent=1 // pred_check
      %p130 = pneg %p28
    $region35: #{tpu_custom_call.1} parent=1 // pred_check_branch
      %132 = sbr.rel (%p130) target = $region37
    $region36: #{tpu_custom_call.1} parent=1 // pred_region
      %v133 = vld [vmem:[%s5] sm:$0x1]
      %v134 = vld [vmem:[%s6] sm:$0x1]
      %vm135 = vcmp.gt.f32.partialorder %v134, 0.5
      %v136 = vsub.f32 1.0, %v133
      %v137 = vsel %vm135, %v133, %v136
      %v138 = vlog2.pop %v137
      %v139 = vmul.f32 %v138, 0.6931472
      %v140 = vmax.f32 %v139, -100.0
      %v141 = vsub.f32 0.0, %v140
      %vm142 = vcmask 155648
      %v143 = vsel %vm142, %v141, 0.0
      %144 = vadd.xlane.f32.xlu0 %v143
      %v145 = vpop.xlane.xlu0 %144
      %v146 = vrot.slane %v145, 4
      %v147 = vadd.f32 %v145, %v146
      %v148 = vrot.slane %v147, 2
      %v149 = vadd.f32 %v147, %v148
      %v150 = vrot.slane %v149, 1
      %v151 = vadd.f32 %v149, %v150
      %s152 = vtos %v151
      %v153 = vstv %s152
      %s154 = sld [smem:[#allocation4]]
      %v155 = vld [vmem:[#allocation2] sm:$0x1]
      %v156 = vld [vmem:[#allocation3] sm:$0x1]
      %v157 = vmul.f32 %v156, 0.5
      %v158 = vadd.f32 %v155, %v157
      %v159 = vrcp.pop 20.0
      %v160 = vmul.f32 %v158, %v159
      %v161 = vmul.f32 %v160, 0.1
      %v162 = vmul.f32 %v153, %v159
      %v163 = vstv %s154
      %v164 = vmul.f32 %v163, %v162
      %v165 = vadd.f32 %v161, %v164
      %166 = vst.msk [vmem:[#allocation5] sm:$0x1] %vm108, %v165
    $region37: #{tpu_custom_call.1} parent=1 // pred_fallthru
      _
    // Predicated region
    $region38: #{tpu_custom_call.1} parent=1 // pred_check
      _
    $region39: #{tpu_custom_call.1} parent=1 // pred_check_branch
      %168 = sbr.rel (0) target = $region41
    $region40: #{tpu_custom_call.1} parent=1 // pred_region
      %s170 = ssub.s32 16, 16
      %171 = vsyncadd [#allocation6], %s170
      %s173 = sshll.u32 [#allocation5], 4
      %s174 = int_to_ptr.vmem [resolvable:$true] %s173
      %176 = dma.vmem_to_hbm [thread:$0]  %s174, 16, %s7, [#allocation6]
    $region41: #{tpu_custom_call.1} parent=1 // pred_fallthru
      _
    // Predicated region
    $region42: #{tpu_custom_call.1} parent=1 // pred_check
      _
    $region43: #{tpu_custom_call.1} parent=1 // pred_check_branch
      %178 = sbr.rel (0) target = $region45
    $region44: #{tpu_custom_call.1} parent=1 // pred_region
      %179 = dma.done [#allocation6], 16
    $region45: #{tpu_custom_call.1} parent=1 // pred_fallthru
      _
    %180 = vsyncpa [#allocation6], 1

</llo_original>
